<compile_context>
chip_gen: v7x
topology: tpu7x:2x2x1
jax: 0.10.0
libtpu: 0.0.40
codegen_flags: <defaults>
</compile_context>

<pallas_src>
import jax
import jax.numpy as jnp
from jax import lax
from jax.experimental import pallas as pl
from jax.experimental.pallas import tpu as pltpu


def _largest_divisor_leq(n, cap):
    cap = max(1, min(n, int(cap)))
    for d in range(cap, 0, -1):
        if n % d == 0:
            return d
    return 1


def _make_embed_kernel(tb, n_vars, n_marks, mm_dtype):
    """Kernel: TB batch elements per grid step, L contracted in-kernel."""
    has_mark = n_marks > 0

    def kernel(*refs):
        if has_mark:
            x_ref, xm_ref, w_ref, b_ref, o_ref = refs
        else:
            x_ref, w_ref, b_ref, o_ref = refs

        w = w_ref[...]                        # [L, D], mm_dtype, VMEM-resident
        b = b_ref[...].astype(jnp.float32)    # [1, D]

        def embed(blk):                       # [L, K] -> [K, D], f32 MXU accumulation
            return lax.dot_general(
                blk.astype(mm_dtype), w,
                (((0,), (0,)), ((), ())),     # contract L directly (no HBM transpose)
                preferred_element_type=jnp.float32)

        # TB is a small static constant -> unrolled straight-line code.
        for t in range(tb):
            acc = embed(x_ref[t])                                   # [N, D]
            if has_mark:
                acc = jnp.concatenate([acc, embed(xm_ref[t])], 0)   # [N+M, D]
            # One aligned full-plane store per batch element (no partial stores
            # starting mid sublane-tile at the x / x_mark boundary).
            o_ref[t] = (acc + b).astype(o_ref.dtype)

    return kernel


def data_embedding_inverted(x, x_mark, weight, bias, *,
                            compute_dtype=None, max_batch_tile=8):
    """
    x:      [B, L, N]
    x_mark: [B, L, M] or None
    weight: [D, L]  (PyTorch nn.Linear layout, in_features == L)
    bias:   [D]
    returns [B, N+M, D] in x.dtype
    """
    B, L, N = x.shape
    D, Lw = weight.shape
    assert Lw == L, "Linear in_features must equal seq_len L"
    if x_mark is not None:
        assert x_mark.shape[0] == B and x_mark.shape[1] == L
        M = x_mark.shape[2]
    else:
        M = 0
    NM = N + M

    out_dtype = x.dtype
    mm_dtype = jnp.dtype(compute_dtype) if compute_dtype is not None else jnp.dtype(x.dtype)

    # Tiny one-off host-side prep (weight is [D, L], small vs. activations).
    w_t = weight.T.astype(mm_dtype)                 # [L, D]
    b2 = bias.reshape(1, D).astype(jnp.float32)     # [1, D]

    # ---- VMEM budget -> batch tile size (per-generation capacity aware) ----------
    x_b = jnp.dtype(x.dtype).itemsize
    xm_b = jnp.dtype(x_mark.dtype).itemsize if x_mark is not None else 0
    o_b = jnp.dtype(out_dtype).itemsize
    mm_b = mm_dtype.itemsize

    try:
        cap = int(getattr(pltpu.get_tpu_info(), "vmem_capacity_bytes", 64 << 20))
    except Exception:
        cap = 64 << 20          # conservative fallback = v7x per-TC VMEM
    budget = int(cap * 0.75)    # ~48 MiB on v7x, ~96 MiB on v5e/v6e

    per_b_blocks = L * N * x_b + L * M * xm_b + NM * D * o_b   # pipelined per batch element
    const_bytes = 2 * (L * D * mm_b + D * 4)                   # weight+bias, double-buffered
    temp_bytes = L * NM * mm_b + 2 * NM * D * 4                # in-kernel cast + f32 acc
    margin = 2 << 20

    avail = budget - const_bytes - temp_bytes - margin
    tb_cap = max(1, avail // (2 * per_b_blocks))               # input/output blocks are 2x-buffered
    tb_cap = min(tb_cap, max_batch_tile)                       # bound static unroll
    if B >= 2:
        tb_cap = min(tb_cap, max(1, B // 2))                   # keep >= 2 grid steps (v7x megacore)
    TB = _largest_divisor_leq(B, tb_cap)
    grid = (B // TB,)

    needed = 2 * TB * per_b_blocks + const_bytes + temp_bytes + margin
    vmem_limit = int(min(max(needed, 32 << 20), budget))       # never below 32 MiB, never above 0.75*cap

    kernel = _make_embed_kernel(TB, N, M, mm_dtype)

    in_specs = [pl.BlockSpec((TB, L, N), lambda i: (i, 0, 0))]
    operands = [x]
    if x_mark is not None:
        in_specs.append(pl.BlockSpec((TB, L, M), lambda i: (i, 0, 0)))
        operands.append(x_mark)
    in_specs += [
        pl.BlockSpec((L, D), lambda i: (0, 0)),   # constant block index -> VMEM-resident
        pl.BlockSpec((1, D), lambda i: (0, 0)),   # bias
    ]
    operands += [w_t, b2]

    cost = pl.CostEstimate(
        flops=2 * B * NM * L * D,
        transcendentals=0,
        bytes_accessed=(B * L * N * x_b + B * L * M * xm_b
                        + L * D * mm_b + D * 4 + B * NM * D * o_b),
    )

    return pl.pallas_call(
        kernel,
        out_shape=jax.ShapeDtypeStruct((B, NM, D), out_dtype),
        grid=grid,
        in_specs=in_specs,
        out_specs=pl.BlockSpec((TB, NM, D), lambda i: (i, 0, 0)),
        compiler_params=pltpu.CompilerParams(
            dimension_semantics=("parallel",),   # independent batch tiles -> megacore on v7x
            vmem_limit_bytes=vmem_limit,
        ),
        cost_estimate=cost,
    )(*operands)


class DataEmbeddingInverted:
    """JAX/Pallas port of DataEmbedding_inverted (inference mode: dropout = identity)."""

    def __init__(self, c_in, d_model, key, dropout=0.1, compute_dtype=None):
        # nn.Linear(c_in, d_model): weight [d_model, c_in], bias [d_model]
        k_w, k_b = jax.random.split(key)
        bound = 1.0 / (c_in ** 0.5)
        self.weight = jax.random.uniform(
            k_w, (d_model, c_in), minval=-bound, maxval=bound, dtype=jnp.float32)
        self.bias = jax.random.uniform(
            k_b, (d_model,), minval=-bound, maxval=bound, dtype=jnp.float32)
        self.c_in = c_in
        self.d_model = d_model
        self.compute_dtype = compute_dtype

    def __call__(self, x, x_mark=None):
        assert x.shape[1] == self.c_in, "Linear in_features must equal seq_len L"
        return data_embedding_inverted(
            x, x_mark, self.weight, self.bias, compute_dtype=self.compute_dtype)


def _reference(x, x_mark, weight, bias):
    xt = jnp.transpose(x, (0, 2, 1))
    if x_mark is not None:
        xt = jnp.concatenate([xt, jnp.transpose(x_mark, (0, 2, 1))], axis=1)
    return jnp.einsum("bnl,dl->bnd", xt.astype(jnp.float32), weight) + bias


if __name__ == "__main__":
    key = jax.random.PRNGKey(0)
    k_x, k_m, k_p, k_x2, k_m2, k_p2 = jax.random.split(key, 6)

    # ---- small module-consistent shapes: batch=2, seq_len(c_in)=16, variates=6,
    #      time-features=3, d_model=32 -----------------------------------------
    B, L, N, M, D = 2, 16, 6, 3, 32
    x = jax.random.normal(k_x, (B, L, N), dtype=jnp.float32)
    x_mark = jax.random.normal(k_m, (B, L, M), dtype=jnp.float32)

    emb = DataEmbeddingInverted(c_in=L, d_model=D, key=k_p)

    # f32 path with x_mark
    out = jax.block_until_ready(emb(x, x_mark))
    ref = _reference(x, x_mark, emb.weight, emb.bias)
    assert out.shape == (B, N + M, D), out.shape
    assert jnp.allclose(out, ref, atol=1e-5, rtol=1e-5), float(jnp.max(jnp.abs(out - ref)))

    # x_mark = None branch
    out2 = jax.block_until_ready(emb(x, None))
    ref2 = _reference(x, None, emb.weight, emb.bias)
    assert out2.shape == (B, N, D)
    assert jnp.allclose(out2, ref2, atol=1e-5, rtol=1e-5)

    # Batch-tiled path (TB > 1) with lane-dense d_model
    B2, L2, N2, M2, D2 = 8, 24, 7, 4, 128
    x3 = jax.random.normal(k_x2, (B2, L2, N2), dtype=jnp.float32)
    xm3 = jax.random.normal(k_m2, (B2, L2, M2), dtype=jnp.float32)
    emb3 = DataEmbeddingInverted(c_in=L2, d_model=D2, key=k_p2)
    out3 = jax.block_until_ready(emb3(x3, xm3))
    ref3 = _reference(x3, xm3, emb3.weight, emb3.bias)
    assert out3.shape == (B2, N2 + M2, D2)
    assert jnp.allclose(out3, ref3, atol=1e-4, rtol=1e-4), float(jnp.max(jnp.abs(out3 - ref3)))

    # bf16 compute path (bf16 operands, f32 accumulation) — looser tolerance vs f32 ref.
    emb_bf16 = DataEmbeddingInverted(c_in=L, d_model=D, key=k_p, compute_dtype=jnp.bfloat16)
    out_bf = jax.block_until_ready(
        emb_bf16(x.astype(jnp.bfloat16), x_mark.astype(jnp.bfloat16)))
    assert out_bf.shape == (B, N + M, D)
    assert jnp.allclose(out_bf.astype(jnp.float32), ref, atol=1e-1, rtol=5e-2), \
        float(jnp.max(jnp.abs(out_bf.astype(jnp.float32) - ref)))

    print("KERNEL_OK")
</pallas_src>

<mosaic_0001>
module attributes {stable_mosaic.version = 11 : i64} {
  func.func @kernel(%arg0: i32, %arg1: memref<1x16x6xf32, #tpu.memory_space<vmem>>, %arg2: memref<1x16x3xf32, #tpu.memory_space<vmem>>, %arg3: memref<16x32xf32, #tpu.memory_space<vmem>>, %arg4: memref<1x32xf32, #tpu.memory_space<vmem>>, %arg5: memref<1x9x32xf32, #tpu.memory_space<vmem>>) attributes {dimension_semantics = [#tpu.dimension_semantics<parallel>], iteration_bounds = array<i64: 2>, scalar_prefetch = 0 : i64, scratch_operands = 0 : i64, tpu.core_type = #tpu.core_type<tc>, window_params = [{transform_indices = @transform_0, window_bounds = array<i64: 1, 16, 6>}, {transform_indices = @transform_1, window_bounds = array<i64: 1, 16, 3>}, {pipeline_mode = #tpu.pipeline_mode<synchronous>, transform_indices = @transform_2, window_bounds = array<i64: 16, 32>}, {pipeline_mode = #tpu.pipeline_mode<synchronous>, transform_indices = @transform_3, window_bounds = array<i64: 1, 32>}, {transform_indices = @transform_4, window_bounds = array<i64: 1, 9, 32>}]} {
    %c0 = arith.constant 0 : index
    %c0_0 = arith.constant 0 : index
    %0 = vector.load %arg3[%c0, %c0_0] : memref<16x32xf32, #tpu.memory_space<vmem>>, vector<16x32xf32>
    %c0_1 = arith.constant 0 : index
    %c0_2 = arith.constant 0 : index
    %1 = vector.load %arg4[%c0_1, %c0_2] : memref<1x32xf32, #tpu.memory_space<vmem>>, vector<1x32xf32>
    %c0_3 = arith.constant 0 : index
    %c0_4 = arith.constant 0 : index
    %c0_5 = arith.constant 0 : index
    %2 = vector.load %arg1[%c0_3, %c0_4, %c0_5] : memref<1x16x6xf32, #tpu.memory_space<vmem>>, vector<1x16x6xf32>
    %3 = vector.shape_cast %2 : vector<1x16x6xf32> to vector<16x6xf32>
    %cst = arith.constant dense<0.000000e+00> : vector<6x32xf32>
    %4 = tpu.matmul %3, %0, %cst {dimension_numbers = #tpu.dot_dimension_numbers<[0], [0], [1], [1], [0, 1, 1, 1], [], []>} : vector<16x6xf32>, vector<16x32xf32>, vector<6x32xf32> -> vector<6x32xf32>
    %c0_6 = arith.constant 0 : index
    %c0_7 = arith.constant 0 : index
    %c0_8 = arith.constant 0 : index
    %5 = vector.load %arg2[%c0_6, %c0_7, %c0_8] : memref<1x16x3xf32, #tpu.memory_space<vmem>>, vector<1x16x3xf32>
    %6 = vector.shape_cast %5 : vector<1x16x3xf32> to vector<16x3xf32>
    %cst_9 = arith.constant dense<0.000000e+00> : vector<3x32xf32>
    %7 = tpu.matmul %6, %0, %cst_9 {dimension_numbers = #tpu.dot_dimension_numbers<[0], [0], [1], [1], [0, 1, 1, 1], [], []>} : vector<16x3xf32>, vector<16x32xf32>, vector<3x32xf32> -> vector<3x32xf32>
    %8 = tpu.concatenate %4, %7 in 0 : vector<6x32xf32>, vector<3x32xf32> -> vector<9x32xf32>
    %9 = vector.broadcast %1 : vector<1x32xf32> to vector<9x32xf32>
    %10 = arith.addf %8, %9 : vector<9x32xf32>
    %c0_10 = arith.constant 0 : index
    %c0_11 = arith.constant 0 : index
    %c0_12 = arith.constant 0 : index
    %11 = vector.load %arg5[%c0_10, %c0_11, %c0_12] : memref<1x9x32xf32, #tpu.memory_space<vmem>>, vector<1x9x32xf32>
    %12 = vector.shape_cast %11 : vector<1x9x32xf32> to vector<9x32xf32>
    %13 = vector.shape_cast %10 : vector<9x32xf32> to vector<1x9x32xf32>
    tpu.vector_store %arg5[%c0_10, %c0_11, %c0_12], %13 {strides = array<i32>} : memref<1x9x32xf32, #tpu.memory_space<vmem>>, vector<1x9x32xf32>,
    return
  }
  func.func @transform_0(%arg0: i32) -> (i32, i32, i32) {
    %c0_i32 = arith.constant 0 : i32
    %c0_i32_0 = arith.constant 0 : i32
    %c0_i32_1 = arith.constant 0 : i32
    return %arg0, %c0_i32, %c0_i32_0 : i32, i32, i32
  }
  func.func @transform_1(%arg0: i32) -> (i32, i32, i32) {
    %c0_i32 = arith.constant 0 : i32
    %c0_i32_0 = arith.constant 0 : i32
    %c0_i32_1 = arith.constant 0 : i32
    return %arg0, %c0_i32, %c0_i32_0 : i32, i32, i32
  }
  func.func @transform_2(%arg0: i32) -> (i32, i32) {
    %c0_i32 = arith.constant 0 : i32
    %c0_i32_0 = arith.constant 0 : i32
    %c0_i32_1 = arith.constant 0 : i32
    return %c0_i32, %c0_i32_0 : i32, i32
  }
  func.func @transform_3(%arg0: i32) -> (i32, i32) {
    %c0_i32 = arith.constant 0 : i32
    %c0_i32_0 = arith.constant 0 : i32
    %c0_i32_1 = arith.constant 0 : i32
    return %c0_i32, %c0_i32_0 : i32, i32
  }
  func.func @transform_4(%arg0: i32) -> (i32, i32, i32) {
    %c0_i32 = arith.constant 0 : i32
    %c0_i32_0 = arith.constant 0 : i32
    %c0_i32_1 = arith.constant 0 : i32
    return %arg0, %c0_i32, %c0_i32_0 : i32, i32, i32
  }
}

</mosaic_0001>

<llo_original>
// kernel: tpu_custom_call.1
$region0: #{tpu_custom_call.1}
  #allocation0 [shape = 'u32[]', space=smem, size = 0x4, offset = 0x4, fixed_abs, tag = 'smem constant byte address 0x4 - core index']
  #allocation1 [shape = 'u32[144,128]{1,0:T(1,128)}', space=vmem, size = 0x12000, scoped, tag = 'internal scratch']
  %s0 = inlined_call_operand.vmem [shape: f32[2,16,6], index: 0, kind: input, shape index: {}]
  %s1 = inlined_call_operand.vmem [shape: f32[2,16,3], index: 1, kind: input, shape index: {}]
  %s2 = inlined_call_operand.vmem [shape: f32[16,32], index: 2, kind: input, shape index: {}]
  %s3 = inlined_call_operand.vmem [shape: f32[1,32], index: 3, kind: input, shape index: {}]
  %s4 = inlined_call_operand.vmem [shape: f32[2,9,32], index: 4, kind: output, shape index: {}]
  %s5 = sld [smem:[#allocation0]]
  $region49: #{tpu_custom_call.1} parent=0
    _
  %s7 = ssub.s32 1, %s5
  %s8 = scalar_select 0, %s7, %s5
  loop: start=0, step=1, limit=4
  $region2: #{tpu_custom_call.1} parent=0 // loop_pre_header
    _
  $region3: #{tpu_custom_call.1} parent=0 // loop_header
    %s10 = sphi 0, %s14
    %p11 = scmp.ge.s32.totalorder %s10, 4
    %s20 = sphi 0, %s22
    %s23 = sphi 0, %s20
    %s24 = sphi 0, %s23
    %s40 = sphi 0, %s24
    %s46 = sphi 0, %s48
    %s49 = sphi 0, %s46
    %s50 = sphi 0, %s49
    %s66 = sphi 0, %s50
    %s70 = sphi 0, %s70
    %s72 = sphi 0, %s70
    %s73 = sphi 0, %s72
    %s87 = sphi 0, %s73
    %s91 = sphi 0, %s91
    %s93 = sphi 0, %s91
    %s94 = sphi 0, %s93
    %s108 = sphi 0, %s94
    %s114 = sphi 0, %s116
    %s117 = sphi 0, %s114
    %s118 = sphi 0, %s117
    %s134 = sphi 0, %s118
  $region4: #{tpu_custom_call.1} parent=0 // loop_header_branch
    %13 = sbr.rel (%p11) target = $region8
  $region5: #{tpu_custom_call.1} parent=0 // loop_body
    %s15 = ssub.s32 %s10, 1
    %s16 = ssub.s32 %s10, 2
    %s17 = sadd.s32 %s10, 1
    %s18 = ssub.s32 %s10, %s17
    %p19 = scmp.eq.s32.totalorder %s18, 0
    %s21 = sadd.s32 %s20, 1
    %s22 = scalar_select %p19, %s20, %s21
    %p25 = pneg %p19
    %p26 = scmp.eq.s32.totalorder %s10, 1
    %p27 = por %p25, %p26
    %p28 = scmp.ne.s32.totalorder %s20, %s23
    %p29 = scmp.eq.s32.totalorder %s10, 0
    %p30 = por %p28, %p29
    %p31 = scmp.ne.s32.totalorder %s20, %s23
    %p32 = scmp.eq.s32.totalorder %s15, 1
    %p33 = por %p31, %p32
    %p34 = scmp.ne.s32.totalorder %s23, %s24
    %p35 = scmp.eq.s32.totalorder %s15, 0
    %p36 = por %p34, %p35
    %p37 = scmp.ne.s32.totalorder %s23, %s24
    %p38 = scmp.eq.s32.totalorder %s16, 1
    %p39 = por %p37, %p38
    %p41 = scmp.ne.s32.totalorder %s24, %s40
    %p42 = scmp.eq.s32.totalorder %s16, 0
    %p43 = por %p41, %p42
    %s44 = ssub.s32 %s10, %s17
    %p45 = scmp.eq.s32.totalorder %s44, 0
    %s47 = sadd.s32 %s46, 1
    %s48 = scalar_select %p45, %s46, %s47
    %p51 = pneg %p45
    %p52 = scmp.eq.s32.totalorder %s10, 1
    %p53 = por %p51, %p52
    %p54 = scmp.ne.s32.totalorder %s46, %s49
    %p55 = scmp.eq.s32.totalorder %s10, 0
    %p56 = por %p54, %p55
    %p57 = scmp.ne.s32.totalorder %s46, %s49
    %p58 = scmp.eq.s32.totalorder %s15, 1
    %p59 = por %p57, %p58
    %p60 = scmp.ne.s32.totalorder %s49, %s50
    %p61 = scmp.eq.s32.totalorder %s15, 0
    %p62 = por %p60, %p61
    %p63 = scmp.ne.s32.totalorder %s49, %s50
    %p64 = scmp.eq.s32.totalorder %s16, 1
    %p65 = por %p63, %p64
    %p67 = scmp.ne.s32.totalorder %s50, %s66
    %p68 = scmp.eq.s32.totalorder %s16, 0
    %p69 = por %p67, %p68
    %s71 = sadd.s32 %s70, 1
    %p74 = scmp.eq.s32.totalorder %s10, 1
    %p75 = scmp.ne.s32.totalorder %s70, %s72
    %p76 = scmp.eq.s32.totalorder %s10, 0
    %p77 = por %p75, %p76
    %p78 = scmp.ne.s32.totalorder %s70, %s72
    %p79 = scmp.eq.s32.totalorder %s15, 1
    %p80 = por %p78, %p79
    %p81 = scmp.ne.s32.totalorder %s72, %s73
    %p82 = scmp.eq.s32.totalorder %s15, 0
    %p83 = por %p81, %p82
    %p84 = scmp.ne.s32.totalorder %s72, %s73
    %p85 = scmp.eq.s32.totalorder %s16, 1
    %p86 = por %p84, %p85
    %p88 = scmp.ne.s32.totalorder %s73, %s87
    %p89 = scmp.eq.s32.totalorder %s16, 0
    %p90 = por %p88, %p89
    %s92 = sadd.s32 %s91, 1
    %p95 = scmp.eq.s32.totalorder %s10, 1
    %p96 = scmp.ne.s32.totalorder %s91, %s93
    %p97 = scmp.eq.s32.totalorder %s10, 0
    %p98 = por %p96, %p97
    %p99 = scmp.ne.s32.totalorder %s91, %s93
    %p100 = scmp.eq.s32.totalorder %s15, 1
    %p101 = por %p99, %p100
    %p102 = scmp.ne.s32.totalorder %s93, %s94
    %p103 = scmp.eq.s32.totalorder %s15, 0
    %p104 = por %p102, %p103
    %p105 = scmp.ne.s32.totalorder %s93, %s94
    %p106 = scmp.eq.s32.totalorder %s16, 1
    %p107 = por %p105, %p106
    %p109 = scmp.ne.s32.totalorder %s94, %s108
    %p110 = scmp.eq.s32.totalorder %s16, 0
    %p111 = por %p109, %p110
    %s112 = ssub.s32 %s10, %s17
    %p113 = scmp.eq.s32.totalorder %s112, 0
    %s115 = sadd.s32 %s114, 1
    %s116 = scalar_select %p113, %s114, %s115
    %p119 = pneg %p113
    %p120 = scmp.eq.s32.totalorder %s10, 1
    %p121 = por %p119, %p120
    %p122 = scmp.ne.s32.totalorder %s114, %s117
    %p123 = scmp.eq.s32.totalorder %s10, 0
    %p124 = por %p122, %p123
    %p125 = scmp.ne.s32.totalorder %s114, %s117
    %p126 = scmp.eq.s32.totalorder %s15, 1
    %p127 = por %p125, %p126
    %p128 = scmp.ne.s32.totalorder %s117, %s118
    %p129 = scmp.eq.s32.totalorder %s15, 0
    %p130 = por %p128, %p129
    %p131 = scmp.ne.s32.totalorder %s117, %s118
    %p132 = scmp.eq.s32.totalorder %s16, 1
    %p133 = por %p131, %p132
    %p135 = scmp.ne.s32.totalorder %s118, %s134
    %p136 = scmp.eq.s32.totalorder %s16, 0
    %p137 = por %p135, %p136
    %p138 = scmp.le.s32.totalorder 1, %s10
    %p139 = scmp.lt.s32.totalorder %s10, 3
    %p140 = pnand %p138, %p139
    %p141 = pneg %p140
    // Predicated region
    $region9: #{tpu_custom_call.1} parent=5 // pred_check
      _
    $region10: #{tpu_custom_call.1} parent=5 // pred_check_branch
      %143 = sbr.rel (%p140) target = $region12
    $region11: #{tpu_custom_call.1} parent=5 // pred_region
      %s144 = ssub.s32 %s10, 1
      // Predicated region
      $region13: #{tpu_custom_call.1} parent=11 // pred_check
        %p145 = pneg %p83
      $region14: #{tpu_custom_call.1} parent=11 // pred_check_branch
        %147 = sbr.rel (%p145) target = $region16
      $region15: #{tpu_custom_call.1} parent=11 // pred_region
        _
      $region16: #{tpu_custom_call.1} parent=11 // pred_fallthru
        _
      // Predicated region
      $region17: #{tpu_custom_call.1} parent=11 // pred_check
        %p148 = pneg %p104
      $region18: #{tpu_custom_call.1} parent=11 // pred_check_branch
        %150 = sbr.rel (%p148) target = $region20
      $region19: #{tpu_custom_call.1} parent=11 // pred_region
        _
      $region20: #{tpu_custom_call.1} parent=11 // pred_fallthru
        _
    $region12: #{tpu_custom_call.1} parent=5 // pred_fallthru
      _
    %p151 = scmp.lt.s32.totalorder %s10, 2
    // Predicated region
    $region21: #{tpu_custom_call.1} parent=5 // pred_check
      %p152 = pneg %p151
    $region22: #{tpu_custom_call.1} parent=5 // pred_check_branch
      %154 = sbr.rel (%p152) target = $region24
    $region23: #{tpu_custom_call.1} parent=5 // pred_region
      // Predicated region
      $region25: #{tpu_custom_call.1} parent=23 // pred_check
        %p155 = pneg %p30
      $region26: #{tpu_custom_call.1} parent=23 // pred_check_branch
        %157 = sbr.rel (%p155) target = $region28
      $region27: #{tpu_custom_call.1} parent=23 // pred_region
        %p158 = scmp.lt.s32.totalorder %s10, 1
        %s159 = scalar_select %p158, %s10, 1
        %s160 = smul.addr %s159, 2
        %s161 = smul.addr %s160, 8
        %s162 = scalar_lea.vmem %s0, %s161
      $region28: #{tpu_custom_call.1} parent=23 // pred_fallthru
        _
      // Predicated region
      $region29: #{tpu_custom_call.1} parent=23 // pred_check
        %p163 = pneg %p56
      $region30: #{tpu_custom_call.1} parent=23 // pred_check_branch
        %165 = sbr.rel (%p163) target = $region32
      $region31: #{tpu_custom_call.1} parent=23 // pred_region
        %p166 = scmp.lt.s32.totalorder %s10, 1
        %s167 = scalar_select %p166, %s10, 1
        %s168 = smul.addr %s167, 2
        %s169 = smul.addr %s168, 8
        %s170 = scalar_lea.vmem %s1, %s169
      $region32: #{tpu_custom_call.1} parent=23 // pred_fallthru
        _
    $region24: #{tpu_custom_call.1} parent=5 // pred_fallthru
      _
    %p171 = scmp.le.s32.totalorder 1, %s10
    %p172 = scmp.lt.s32.totalorder %s10, 3
    %p173 = pnand %p171, %p172
    %p174 = pneg %p173
    // Predicated region
    $region33: #{tpu_custom_call.1} parent=5 // pred_check
      _
    $region34: #{tpu_custom_call.1} parent=5 // pred_check_branch
      %176 = sbr.rel (%p173) target = $region36
    $region35: #{tpu_custom_call.1} parent=5 // pred_region
      %s177 = ssub.s32 %s10, 1
      %p178 = scmp.lt.s32.totalorder %s15, 1
      %s179 = scalar_select %p178, %s15, 1
      %s180 = smul.addr %s179, 2
      %s181 = smul.addr %s180, 8
      %s182 = scalar_lea.vmem %s0, %s181
      %p183 = pneg %p36
      %p184 = pneg %p33
      %p185 = scmp.lt.s32.totalorder %s15, 1
      %s186 = scalar_select %p185, %s15, 1
      %s187 = smul.addr %s186, 2
      %s188 = smul.addr %s187, 8
      %s189 = scalar_lea.vmem %s1, %s188
      %p190 = pneg %p62
      %p191 = pneg %p59
      %p192 = pneg %p83
      %p193 = pneg %p80
      %p194 = pneg %p104
      %p195 = pneg %p101
      %p196 = pneg %p130
      %p197 = pneg %p127
      %p198 = scmp.lt.s32.totalorder %s15, 1
      %s199 = scalar_select %p198, %s15, 1
      %s200 = smul.addr %s199, 2
      %s201 = smul.addr %s200, 8
      %s202 = scalar_lea.vmem %s4, %s201
      %p203 = scmp.lt.s32.totalorder %s15, 1
      %s204 = scalar_select %p203, %s15, 1
      %s205 = smul.addr %s204, 2
      %s206 = smul.addr %s205, 8
      %s207 = scalar_lea.vmem %s0, %s206
      %p208 = scmp.lt.s32.totalorder %s15, 1
      %s209 = scalar_select %p208, %s15, 1
      %s210 = smul.addr %s209, 2
      %s211 = smul.addr %s210, 8
      %s212 = scalar_lea.vmem %s1, %s211
      %p213 = scmp.lt.s32.totalorder %s15, 1
      %s214 = scalar_select %p213, %s15, 1
      %s215 = smul.addr %s214, 2
      %s216 = smul.addr %s215, 8
      %s217 = scalar_lea.vmem %s4, %s216
      %v218 = vld [vmem:[%s2] sm:$0xff]
      %v219 = vld [vmem:[%s2 + $0x8] sm:$0xff]
      %v220 = vld [vmem:[%s3] sm:$0x1]
      %v221 = vld [vmem:[%s207] sm:$0xff]
      %v222 = vld [vmem:[%s207 + $0x8] sm:$0xff]
      %223 = vxpose.xlu0.b32.start [1/16] %v221, 128
      %224 = vxpose.xlu0.b32.cont [2/16] %v222, 128
      %225 = vxpose.xlu0.b32.cont [3/16] 0.0, 128
      %226 = vxpose.xlu0.b32.cont [4/16] 0.0, 128
      %227 = vxpose.xlu0.b32.cont [5/16] 0.0, 128
      %228 = vxpose.xlu0.b32.cont [6/16] 0.0, 128
      %229 = vxpose.xlu0.b32.cont [7/16] 0.0, 128
      %230 = vxpose.xlu0.b32.cont [8/16] 0.0, 128
      %231 = vxpose.xlu0.b32.cont [9/16] 0.0, 128
      %232 = vxpose.xlu0.b32.cont [10/16] 0.0, 128
      %233 = vxpose.xlu0.b32.cont [11/16] 0.0, 128
      %234 = vxpose.xlu0.b32.cont [12/16] 0.0, 128
      %235 = vxpose.xlu0.b32.cont [13/16] 0.0, 128
      %236 = vxpose.xlu0.b32.cont [14/16] 0.0, 128
      %237 = vxpose.xlu0.b32.cont [15/16] 0.0, 128
      %238 = vxpose.xlu0.b32.end [16/16] 0.0, 128
      %v239 = vpop.trf.xlu0
      %v240 = vpop.trf.xlu0
      %v241 = vpop.trf.xlu0
      %v242 = vpop.trf.xlu0
      %v243 = vpop.trf.xlu0
      %v244 = vpop.trf.xlu0
      %v245 = vpop.trf.xlu0
      %v246 = vpop.trf.xlu0
      %v247 = vpop.trf.xlu0
      %v248 = vpop.trf.xlu0
      %v249 = vpop.trf.xlu0
      %v250 = vpop.trf.xlu0
      %v251 = vpop.trf.xlu0
      %v252 = vpop.trf.xlu0
      %v253 = vpop.trf.xlu0
      %v254 = vpop.trf.xlu0
      %vm255 = vcmask 130048
      %v257 = vsel %vm255, %v239, 0
      %259 = vmatprep.subr.mxu0 0.0
      %260 = vmatpush1.msra.mxu0 %v218
      %261 = vmatprep.subr.mxu0 0.0
      %262 = vmatpush1.msra.mxu0 %v219
      %263 = vmatprep.subr.mxu0 0.0
      %264 = vmatpush1.msra.mxu0 0.0
      %265 = vmatprep.subr.mxu0 0.0
      %266 = vmatpush1.msra.mxu0 0.0
      %267 = vmatprep.subr.mxu0 0.0
      %268 = vmatpush1.msra.mxu0 0.0
      %269 = vmatprep.subr.mxu0 0.0
      %270 = vmatpush1.msra.mxu0 0.0
      %271 = vmatprep.subr.mxu0 0.0
      %272 = vmatpush1.msra.mxu0 0.0
      %273 = vmatprep.subr.mxu0 0.0
      %274 = vmatpush1.msra.mxu0 0.0
      %275 = vmatprep.subr.mxu0 0.0
      %276 = vmatpush1.msra.mxu0 0.0
      %277 = vmatprep.subr.mxu0 0.0
      %278 = vmatpush1.msra.mxu0 0.0
      %279 = vmatprep.subr.mxu0 0.0
      %280 = vmatpush1.msra.mxu0 0.0
      %281 = vmatprep.subr.mxu0 0.0
      %282 = vmatpush1.msra.mxu0 0.0
      %283 = vmatprep.subr.mxu0 0.0
      %284 = vmatpush1.msra.mxu0 0.0
      %285 = vmatprep.subr.mxu0 0.0
      %286 = vmatpush1.msra.mxu0 0.0
      %287 = vmatprep.subr.mxu0 0.0
      %288 = vmatpush1.msra.mxu0 0.0
      %289 = vmatprep.subr.mxu0 0.0
      %290 = vmatpush1.msra.mxu0 0.0
      %291 = vmatprep.subr.mxu0 0.0
      %292 = vmatpush1.msra.mxu0 0.0
      %293 = vmatprep.subr.mxu0 0.0
      %294 = vmatpush1.msra.mxu0 0.0
      %295 = vmatprep.subr.mxu0 0.0
      %296 = vmatpush1.msra.mxu0 0.0
      %297 = vmatprep.subr.mxu0 0.0
      %298 = vmatpush1.msra.mxu0 0.0
      %299 = vmatprep.subr.mxu0 0.0
      %300 = vmatpush1.msra.mxu0 0.0
      %301 = vmatprep.subr.mxu0 0.0
      %302 = vmatpush1.msra.mxu0 0.0
      %303 = vmatprep.subr.mxu0 0.0
      %304 = vmatpush1.msra.mxu0 0.0
      %305 = vmatprep.subr.mxu0 0.0
      %306 = vmatpush1.msra.mxu0 0.0
      %307 = vmatprep.subr.mxu0 0.0
      %308 = vmatpush1.msra.mxu0 0.0
      %309 = vmatprep.subr.mxu0 0.0
      %310 = vmatpush1.msra.mxu0 0.0
      %311 = vmatprep.subr.mxu0 0.0
      %312 = vmatpush1.msra.mxu0 0.0
      %313 = vmatprep.subr.mxu0 0.0
      %314 = vmatpush1.msra.mxu0 0.0
      %315 = vmatprep.subr.mxu0 0.0
      %316 = vmatpush1.msra.mxu0 0.0
      %317 = vmatprep.subr.mxu0 0.0
      %318 = vmatpush1.msra.mxu0 0.0
      %319 = vmatprep.subr.mxu0 0.0
      %320 = vmatpush1.msra.mxu0 0.0
      %321 = vmatprep.subr.mxu0 0.0
      %322 = vmatpush1.msra.mxu0 0.0
      %323 = vmatprep.mubr.f32.mxu0 0.0
      %324 = vmatmul.mubr.f32.gmra.mrb[0].mxu0 %v257
      %v325 = vpop.f32.mrb[0].mxu0
      %v326 = vadd.f32 0.0, %v325
      %v327 = vpop.f32.mrb[0].mxu0
      %328 = vdwg.mxu0
      %v329 = vld [vmem:[%s212] sm:$0xff]
      %v330 = vld [vmem:[%s212 + $0x8] sm:$0xff]
      %331 = vxpose.xlu0.b32.start [1/16] %v329, 128
      %332 = vxpose.xlu0.b32.cont [2/16] %v330, 128
      %333 = vxpose.xlu0.b32.cont [3/16] 0.0, 128
      %334 = vxpose.xlu0.b32.cont [4/16] 0.0, 128
      %335 = vxpose.xlu0.b32.cont [5/16] 0.0, 128
      %336 = vxpose.xlu0.b32.cont [6/16] 0.0, 128
      %337 = vxpose.xlu0.b32.cont [7/16] 0.0, 128
      %338 = vxpose.xlu0.b32.cont [8/16] 0.0, 128
      %339 = vxpose.xlu0.b32.cont [9/16] 0.0, 128
      %340 = vxpose.xlu0.b32.cont [10/16] 0.0, 128
      %341 = vxpose.xlu0.b32.cont [11/16] 0.0, 128
      %342 = vxpose.xlu0.b32.cont [12/16] 0.0, 128
      %343 = vxpose.xlu0.b32.cont [13/16] 0.0, 128
      %344 = vxpose.xlu0.b32.cont [14/16] 0.0, 128
      %345 = vxpose.xlu0.b32.cont [15/16] 0.0, 128
      %346 = vxpose.xlu0.b32.end [16/16] 0.0, 128
      %v347 = vpop.trf.xlu0
      %v348 = vpop.trf.xlu0
      %v349 = vpop.trf.xlu0
      %v350 = vpop.trf.xlu0
      %v351 = vpop.trf.xlu0
      %v352 = vpop.trf.xlu0
      %v353 = vpop.trf.xlu0
      %v354 = vpop.trf.xlu0
      %v355 = vpop.trf.xlu0
      %v356 = vpop.trf.xlu0
      %v357 = vpop.trf.xlu0
      %v358 = vpop.trf.xlu0
      %v359 = vpop.trf.xlu0
      %v360 = vpop.trf.xlu0
      %v361 = vpop.trf.xlu0
      %v362 = vpop.trf.xlu0
      %v364 = vsel %vm255, %v347, 0
      %366 = vmatprep.subr.mxu0 0.0
      %367 = vmatpush1.msra.mxu0 %v218
      %368 = vmatprep.subr.mxu0 0.0
      %369 = vmatpush1.msra.mxu0 %v219
      %370 = vmatprep.subr.mxu0 0.0
      %371 = vmatpush1.msra.mxu0 0.0
      %372 = vmatprep.subr.mxu0 0.0
      %373 = vmatpush1.msra.mxu0 0.0
      %374 = vmatprep.subr.mxu0 0.0
      %375 = vmatpush1.msra.mxu0 0.0
      %376 = vmatprep.subr.mxu0 0.0
      %377 = vmatpush1.msra.mxu0 0.0
      %378 = vmatprep.subr.mxu0 0.0
      %379 = vmatpush1.msra.mxu0 0.0
      %380 = vmatprep.subr.mxu0 0.0
      %381 = vmatpush1.msra.mxu0 0.0
      %382 = vmatprep.subr.mxu0 0.0
      %383 = vmatpush1.msra.mxu0 0.0
      %384 = vmatprep.subr.mxu0 0.0
      %385 = vmatpush1.msra.mxu0 0.0
      %386 = vmatprep.subr.mxu0 0.0
      %387 = vmatpush1.msra.mxu0 0.0
      %388 = vmatprep.subr.mxu0 0.0
      %389 = vmatpush1.msra.mxu0 0.0
      %390 = vmatprep.subr.mxu0 0.0
      %391 = vmatpush1.msra.mxu0 0.0
      %392 = vmatprep.subr.mxu0 0.0
      %393 = vmatpush1.msra.mxu0 0.0
      %394 = vmatprep.subr.mxu0 0.0
      %395 = vmatpush1.msra.mxu0 0.0
      %396 = vmatprep.subr.mxu0 0.0
      %397 = vmatpush1.msra.mxu0 0.0
      %398 = vmatprep.subr.mxu0 0.0
      %399 = vmatpush1.msra.mxu0 0.0
      %400 = vmatprep.subr.mxu0 0.0
      %401 = vmatpush1.msra.mxu0 0.0
      %402 = vmatprep.subr.mxu0 0.0
      %403 = vmatpush1.msra.mxu0 0.0
      %404 = vmatprep.subr.mxu0 0.0
      %405 = vmatpush1.msra.mxu0 0.0
      %406 = vmatprep.subr.mxu0 0.0
      %407 = vmatpush1.msra.mxu0 0.0
      %408 = vmatprep.subr.mxu0 0.0
      %409 = vmatpush1.msra.mxu0 0.0
      %410 = vmatprep.subr.mxu0 0.0
      %411 = vmatpush1.msra.mxu0 0.0
      %412 = vmatprep.subr.mxu0 0.0
      %413 = vmatpush1.msra.mxu0 0.0
      %414 = vmatprep.subr.mxu0 0.0
      %415 = vmatpush1.msra.mxu0 0.0
      %416 = vmatprep.subr.mxu0 0.0
      %417 = vmatpush1.msra.mxu0 0.0
      %418 = vmatprep.subr.mxu0 0.0
      %419 = vmatpush1.msra.mxu0 0.0
      %420 = vmatprep.subr.mxu0 0.0
      %421 = vmatpush1.msra.mxu0 0.0
      %422 = vmatprep.subr.mxu0 0.0
      %423 = vmatpush1.msra.mxu0 0.0
      %424 = vmatprep.subr.mxu0 0.0
      %425 = vmatpush1.msra.mxu0 0.0
      %426 = vmatprep.subr.mxu0 0.0
      %427 = vmatpush1.msra.mxu0 0.0
      %428 = vmatprep.subr.mxu0 0.0
      %429 = vmatpush1.msra.mxu0 0.0
      %430 = vmatprep.mubr.f32.mxu0 0.0
      %431 = vmatmul.mubr.f32.gmra.mrb[0].mxu0 %v364
      %v432 = vpop.f32.mrb[0].mxu0
      %v433 = vadd.f32 0.0, %v432
      %v434 = vpop.f32.mrb[0].mxu0
      %435 = vdwg.mxu0
      %v437 = vrot.slane %v433, 2
      %vm439 = vcmask 1045504
      %v440 = vsel %vm439, %v326, %v437
      %v442 = vlaneseq
      %v443 = vshrl.u32 %v442, 7
      %v444 = vsub.s32 0, %v443
      %v445 = vrot.slane %v220, %v444
      %v447 = vadd.f32 %v440, %v445
      %v448 = vadd.f32 %v437, %v445
      %vm449 = vcmask 261120
      %450 = vst.msk [vmem:[%s217] sm:$0xff] %vm449, %v447
      %vm451 = vcmask 253952
      %452 = vst.msk [vmem:[%s217 + $0x8] sm:$0x1] %vm451, %v448
      %p453 = scmp.lt.s32.totalorder %s15, 1
      %s454 = scalar_select %p453, %s15, 1
      %s455 = smul.addr %s454, 2
      %s456 = smul.addr %s455, 8
      %s457 = scalar_lea.vmem %s4, %s456
      // Predicated region
      $region37: #{tpu_custom_call.1} parent=35 // pred_check
        %p458 = pneg %p127
      $region38: #{tpu_custom_call.1} parent=35 // pred_check_branch
        %460 = sbr.rel (%p458) target = $region40
      $region39: #{tpu_custom_call.1} parent=35 // pred_region
        _
      $region40: #{tpu_custom_call.1} parent=35 // pred_fallthru
        _
    $region36: #{tpu_custom_call.1} parent=5 // pred_fallthru
      _
    %p461 = scmp.le.s32.totalorder 2, %s10
    // Predicated region
    $region41: #{tpu_custom_call.1} parent=5 // pred_check
      %p462 = pneg %p461
    $region42: #{tpu_custom_call.1} parent=5 // pred_check_branch
      %464 = sbr.rel (%p462) target = $region44
    $region43: #{tpu_custom_call.1} parent=5 // pred_region
      %s465 = ssub.s32 %s10, 2
      // Predicated region
      $region45: #{tpu_custom_call.1} parent=43 // pred_check
        %p466 = pneg %p133
      $region46: #{tpu_custom_call.1} parent=43 // pred_check_branch
        %468 = sbr.rel (%p466) target = $region48
      $region47: #{tpu_custom_call.1} parent=43 // pred_region
        %p469 = scmp.lt.s32.totalorder %s16, 1
        %s470 = scalar_select %p469, %s16, 1
        %s471 = smul.addr %s470, 2
        %s472 = smul.addr %s471, 8
        %s473 = scalar_lea.vmem %s4, %s472
      $region48: #{tpu_custom_call.1} parent=43 // pred_fallthru
        _
    $region44: #{tpu_custom_call.1} parent=5 // pred_fallthru
      _
  $region6: #{tpu_custom_call.1} parent=0 // loop_footer
    %s14 = sadd.s32 1, %s10
  $region7: #{tpu_custom_call.1} parent=0 // loop_footer_branch
    %9 = sbr.rel target = $region3
  $region8: #{tpu_custom_call.1} parent=0 // loop_exit
    _

</llo_original>
